<compile_context>
chip_gen: v7x
topology: tpu7x:2x2x1
jax: 0.10.0
libtpu: 0.0.40
codegen_flags: <defaults>
</compile_context>

<pallas_src>
import jax
import jax.numpy as jnp
from jax.experimental import pallas as pl
from jax.experimental.pallas import tpu as pltpu


def _round_up(n: int, m: int) -> int:
    return ((n + m - 1) // m) * m


def _vmem_tile_bytes(shape, dtype) -> int:
    """Bytes one buffer of `shape` occupies in VMEM (last two dims padded to (8,128))."""
    s = list(shape) if len(shape) >= 2 else [1, shape[0]]
    s[-1] = _round_up(s[-1], 128)
    s[-2] = _round_up(s[-2], 8)
    n = 1
    for d in s:
        n *= d
    return n * jnp.dtype(dtype).itemsize


def mlp_kernel(x_ref, w1_ref, b1_ref, w2_ref, b2_ref, o_ref):
    # fc1 (+ folded BatchNorm): [TB, I] @ [I, H] on the MXU, f32 accumulation.
    x = x_ref[...].astype(w1_ref.dtype)          # cast to matmul dtype in VMEM (no extra HBM pass)
    h = jnp.dot(x, w1_ref[...], preferred_element_type=jnp.float32)
    h = jnp.maximum(h + b1_ref[...], 0.0)        # f32 bias + ReLU epilogue
    # Dropout(p=0.2) in eval mode -> identity.
    # fc2: [TB, H] @ [H, O], f32 accumulation; f32 bias; single cast at the store.
    out = jnp.dot(h.astype(w2_ref.dtype), w2_ref[...], preferred_element_type=jnp.float32)
    o_ref[...] = (out + b2_ref[...]).astype(o_ref.dtype)


def prepare_mlp_params(params, *, compute_dtype=jnp.bfloat16):
    """One-time (model-load) prep: fold BN running stats into fc1, cast & reshape.

    The fold is done in f32 before the cast.  Note: a very small running_var inflates the folded
    weight magnitude and hence bf16 quantization error; pass compute_dtype=jnp.float32 if that
    ever matters.
    """
    w1, b1, gamma, beta, run_mean, run_var, w2, b2, eps = params
    inv_std = 1.0 / jnp.sqrt(run_var + eps)                    # [H]
    scale = gamma * inv_std                                    # [H]
    w1f = (w1 * scale[None, :]).astype(compute_dtype)          # BN scale folded column-wise
    b1f = ((b1 - run_mean) * scale + beta).reshape(1, -1).astype(jnp.float32)
    w2c = w2.astype(compute_dtype)
    b2c = b2.reshape(1, -1).astype(jnp.float32)
    return w1f, b1f, w2c, b2c


def mlp_forward(x, prepared, *, block_b=512):
    """Fused eval-mode MLP forward. x: [B, I] -> [B, O]."""
    w1f, b1f, w2c, b2c = prepared
    B, I = x.shape
    H = w1f.shape[1]
    O = w2c.shape[1]

    # Batch tile: as large as the budget allows (sweep-friendly), sublane-aligned, and giving
    # >=2 grid steps when B allows so the "parallel" axis can use v7x's second TensorCore.
    TB = min(block_b, _round_up(B, 8))
    if TB >= B and B >= 16:
        TB = _round_up((B + 1) // 2, 8)
    B_pad = _round_up(B, TB)
    x_p = x if B_pad == B else jnp.pad(x, ((0, B_pad - B), (0, 0)))
    grid = (B_pad // TB,)

    # Explicit VMEM budget: resident weights (counted double-buffered to stay safe in the
    # fallback), double-buffered x/out streams, and the f32 intermediate h; capped for v7x.
    wdt = w1f.dtype
    weight_bytes = (_vmem_tile_bytes((I, H), wdt) + _vmem_tile_bytes((1, H), jnp.float32)
                    + _vmem_tile_bytes((H, O), wdt) + _vmem_tile_bytes((1, O), jnp.float32))
    stream_bytes = 2 * (_vmem_tile_bytes((TB, I), x.dtype) + _vmem_tile_bytes((TB, O), x.dtype))
    h_bytes = _vmem_tile_bytes((TB, H), jnp.float32)
    vmem_limit = min(64 << 20,
                     max(16 << 20, 2 * (2 * weight_bytes + stream_bytes + h_bytes) + (8 << 20)))

    cost = pl.CostEstimate(
        flops=2 * B_pad * (I * H + H * O),
        transcendentals=0,
        bytes_accessed=(x_p.size * x_p.dtype.itemsize
                        + w1f.size * w1f.dtype.itemsize + w2c.size * w2c.dtype.itemsize
                        + b1f.size * 4 + b2c.size * 4
                        + B_pad * O * x.dtype.itemsize),
    )

    def run(single_buffer_weights: bool):
        w_kw = {"pipeline_mode": pl.Buffered(1)} if single_buffer_weights else {}
        in_specs = [
            pl.BlockSpec((TB, I), lambda i: (i, 0)),            # x: streams over batch
            pl.BlockSpec((I, H), lambda i: (0, 0), **w_kw),     # w1 (BN folded): VMEM-resident
            pl.BlockSpec((1, H), lambda i: (0, 0), **w_kw),     # fused fc1/BN bias
            pl.BlockSpec((H, O), lambda i: (0, 0), **w_kw),     # w2: VMEM-resident
            pl.BlockSpec((1, O), lambda i: (0, 0), **w_kw),     # b2
        ]
        return pl.pallas_call(
            mlp_kernel,
            out_shape=jax.ShapeDtypeStruct((B_pad, O), x.dtype),
            grid=grid,
            in_specs=in_specs,
            out_specs=pl.BlockSpec((TB, O), lambda i: (i, 0)),
            compiler_params=pltpu.CompilerParams(
                dimension_semantics=("parallel",),
                vmem_limit_bytes=int(vmem_limit),
            ),
            cost_estimate=cost,
        )(x_p, w1f, b1f, w2c, b2c)

    try:
        out = run(single_buffer_weights=True)
    except Exception:
        # pipeline_mode=pl.Buffered(1) unsupported on this jax build: fall back to the default
        # double-buffered specs (identical semantics, 2x weight VMEM).
        out = run(single_buffer_weights=False)

    return out if B_pad == B else out[:B]


def reference_forward(x, params):
    w1, b1, gamma, beta, run_mean, run_var, w2, b2, eps = params
    h = x @ w1 + b1
    h = (h - run_mean) / jnp.sqrt(run_var + eps) * gamma + beta
    h = jnp.maximum(h, 0.0)
    return h @ w2 + b2


if __name__ == "__main__":
    batch, input_dim, hidden_dim, output_dim = 8, 32, 64, 16

    key = jax.random.PRNGKey(0)
    keys = jax.random.split(key, 9)

    # Deterministic synthetic parameters (shapes match nn.Linear / nn.BatchNorm1d).
    w1 = jax.random.normal(keys[0], (input_dim, hidden_dim), jnp.float32) * 0.1
    b1 = jax.random.normal(keys[1], (hidden_dim,), jnp.float32) * 0.1
    gamma = 1.0 + 0.1 * jax.random.normal(keys[2], (hidden_dim,), jnp.float32)
    beta = 0.1 * jax.random.normal(keys[3], (hidden_dim,), jnp.float32)
    run_mean = 0.1 * jax.random.normal(keys[4], (hidden_dim,), jnp.float32)
    run_var = jnp.abs(1.0 + 0.1 * jax.random.normal(keys[5], (hidden_dim,), jnp.float32))
    w2 = jax.random.normal(keys[6], (hidden_dim, output_dim), jnp.float32) * 0.1
    b2 = 0.1 * jax.random.normal(keys[7], (output_dim,), jnp.float32)
    eps = 1e-5

    params = (w1, b1, gamma, beta, run_mean, run_var, w2, b2, eps)
    x = jax.random.normal(keys[8], (batch, input_dim), jnp.float32)

    ref = reference_forward(x, params)

    # f32 operand path: tight tolerance.
    prep_f32 = prepare_mlp_params(params, compute_dtype=jnp.float32)
    out_f32 = mlp_forward(x, prep_f32)
    jax.block_until_ready(out_f32)
    assert out_f32.shape == (batch, output_dim)
    assert jnp.allclose(out_f32, ref, atol=1e-4, rtol=1e-4), "f32 path mismatch"

    # bf16 operand path (default; f32 MXU accumulation / f32 epilogue): quantization tolerance.
    prep_bf16 = prepare_mlp_params(params)   # compute_dtype=jnp.bfloat16
    out_bf16 = mlp_forward(x, prep_bf16)
    jax.block_until_ready(out_bf16)
    assert out_bf16.shape == (batch, output_dim)
    assert jnp.allclose(out_bf16, ref, atol=5e-2, rtol=5e-2), "bf16 path mismatch"

    print("KERNEL_OK")
</pallas_src>

<mosaic_0001>
module attributes {stable_mosaic.version = 11 : i64} {
  func.func @mlp_kernel(%arg0: i32, %arg1: memref<8x32xf32, #tpu.memory_space<vmem>>, %arg2: memref<32x64xf32, #tpu.memory_space<vmem>>, %arg3: memref<1x64xf32, #tpu.memory_space<vmem>>, %arg4: memref<64x16xf32, #tpu.memory_space<vmem>>, %arg5: memref<1x16xf32, #tpu.memory_space<vmem>>, %arg6: memref<8x16xf32, #tpu.memory_space<vmem>>) attributes {dimension_semantics = [#tpu.dimension_semantics<parallel>], iteration_bounds = array<i64: 1>, scalar_prefetch = 0 : i64, scratch_operands = 0 : i64, tpu.core_type = #tpu.core_type<tc>, window_params = [{transform_indices = @transform_0, window_bounds = array<i64: 8, 32>}, {pipeline_mode = #tpu.pipeline_mode<synchronous>, transform_indices = @transform_1, window_bounds = array<i64: 32, 64>}, {pipeline_mode = #tpu.pipeline_mode<synchronous>, transform_indices = @transform_2, window_bounds = array<i64: 1, 64>}, {pipeline_mode = #tpu.pipeline_mode<synchronous>, transform_indices = @transform_3, window_bounds = array<i64: 64, 16>}, {pipeline_mode = #tpu.pipeline_mode<synchronous>, transform_indices = @transform_4, window_bounds = array<i64: 1, 16>}, {transform_indices = @transform_5, window_bounds = array<i64: 8, 16>}]} {
    %c0 = arith.constant 0 : index
    %c0_0 = arith.constant 0 : index
    %0 = vector.load %arg1[%c0, %c0_0] : memref<8x32xf32, #tpu.memory_space<vmem>>, vector<8x32xf32>
    %c0_1 = arith.constant 0 : index
    %c0_2 = arith.constant 0 : index
    %1 = vector.load %arg2[%c0_1, %c0_2] : memref<32x64xf32, #tpu.memory_space<vmem>>, vector<32x64xf32>
    %cst = arith.constant dense<0.000000e+00> : vector<8x64xf32>
    %2 = tpu.matmul %0, %1, %cst {dimension_numbers = #tpu.dot_dimension_numbers<[1], [0], [0], [1], [0, 0, 1, 1], [], []>} : vector<8x32xf32>, vector<32x64xf32>, vector<8x64xf32> -> vector<8x64xf32>
    %c0_3 = arith.constant 0 : index
    %c0_4 = arith.constant 0 : index
    %3 = vector.load %arg3[%c0_3, %c0_4] : memref<1x64xf32, #tpu.memory_space<vmem>>, vector<1x64xf32>
    %4 = vector.broadcast %3 : vector<1x64xf32> to vector<8x64xf32>
    %5 = arith.addf %2, %4 : vector<8x64xf32>
    %cst_5 = arith.constant 0.000000e+00 : f32
    %6 = vector.broadcast %cst_5 : f32 to vector<8x64xf32>
    %7 = arith.maximumf %5, %6 : vector<8x64xf32>
    %c0_6 = arith.constant 0 : index
    %c0_7 = arith.constant 0 : index
    %8 = vector.load %arg4[%c0_6, %c0_7] : memref<64x16xf32, #tpu.memory_space<vmem>>, vector<64x16xf32>
    %cst_8 = arith.constant dense<0.000000e+00> : vector<8x16xf32>
    %9 = tpu.matmul %7, %8, %cst_8 {dimension_numbers = #tpu.dot_dimension_numbers<[1], [0], [0], [1], [0, 0, 1, 1], [], []>} : vector<8x64xf32>, vector<64x16xf32>, vector<8x16xf32> -> vector<8x16xf32>
    %c0_9 = arith.constant 0 : index
    %c0_10 = arith.constant 0 : index
    %10 = vector.load %arg5[%c0_9, %c0_10] : memref<1x16xf32, #tpu.memory_space<vmem>>, vector<1x16xf32>
    %11 = vector.broadcast %10 : vector<1x16xf32> to vector<8x16xf32>
    %12 = arith.addf %9, %11 : vector<8x16xf32>
    %c0_11 = arith.constant 0 : index
    %c0_12 = arith.constant 0 : index
    %13 = vector.load %arg6[%c0_11, %c0_12] : memref<8x16xf32, #tpu.memory_space<vmem>>, vector<8x16xf32>
    tpu.vector_store %arg6[%c0_11, %c0_12], %12 {strides = array<i32>} : memref<8x16xf32, #tpu.memory_space<vmem>>, vector<8x16xf32>,
    return
  }
  func.func @transform_0(%arg0: i32) -> (i32, i32) {
    %c0_i32 = arith.constant 0 : i32
    %c0_i32_0 = arith.constant 0 : i32
    return %arg0, %c0_i32 : i32, i32
  }
  func.func @transform_1(%arg0: i32) -> (i32, i32) {
    %c0_i32 = arith.constant 0 : i32
    %c0_i32_0 = arith.constant 0 : i32
    %c0_i32_1 = arith.constant 0 : i32
    return %c0_i32, %c0_i32_0 : i32, i32
  }
  func.func @transform_2(%arg0: i32) -> (i32, i32) {
    %c0_i32 = arith.constant 0 : i32
    %c0_i32_0 = arith.constant 0 : i32
    %c0_i32_1 = arith.constant 0 : i32
    return %c0_i32, %c0_i32_0 : i32, i32
  }
  func.func @transform_3(%arg0: i32) -> (i32, i32) {
    %c0_i32 = arith.constant 0 : i32
    %c0_i32_0 = arith.constant 0 : i32
    %c0_i32_1 = arith.constant 0 : i32
    return %c0_i32, %c0_i32_0 : i32, i32
  }
  func.func @transform_4(%arg0: i32) -> (i32, i32) {
    %c0_i32 = arith.constant 0 : i32
    %c0_i32_0 = arith.constant 0 : i32
    %c0_i32_1 = arith.constant 0 : i32
    return %c0_i32, %c0_i32_0 : i32, i32
  }
  func.func @transform_5(%arg0: i32) -> (i32, i32) {
    %c0_i32 = arith.constant 0 : i32
    %c0_i32_0 = arith.constant 0 : i32
    return %arg0, %c0_i32 : i32, i32
  }
}

module attributes {stable_mosaic.version = 11 : i64} {
  func.func @mlp_kernel(%arg0: i32, %arg1: memref<8x32xf32, #tpu.memory_space<vmem>>, %arg2: memref<32x64xf32, #tpu.memory_space<vmem>>, %arg3: memref<1x64xf32, #tpu.memory_space<vmem>>, %arg4: memref<64x16xf32, #tpu.memory_space<vmem>>, %arg5: memref<1x16xf32, #tpu.memory_space<vmem>>, %arg6: memref<8x16xf32, #tpu.memory_space<vmem>>) attributes {dimension_semantics = [#tpu.dimension_semantics<parallel>], iteration_bounds = array<i64: 1>, scalar_prefetch = 0 : i64, scratch_operands = 0 : i64, tpu.core_type = #tpu.core_type<tc>, window_params = [{transform_indices = @transform_0, window_bounds = array<i64: 8, 32>}, {pipeline_mode = #tpu.pipeline_mode<synchronous>, transform_indices = @transform_1, window_bounds = array<i64: 32, 64>}, {pipeline_mode = #tpu.pipeline_mode<synchronous>, transform_indices = @transform_2, window_bounds = array<i64: 1, 64>}, {pipeline_mode = #tpu.pipeline_mode<synchronous>, transform_indices = @transform_3, window_bounds = array<i64: 64, 16>}, {pipeline_mode = #tpu.pipeline_mode<synchronous>, transform_indices = @transform_4, window_bounds = array<i64: 1, 16>}, {transform_indices = @transform_5, window_bounds = array<i64: 8, 16>}]} {
    %c0 = arith.constant 0 : index
    %c0_0 = arith.constant 0 : index
    %0 = vector.load %arg1[%c0, %c0_0] : memref<8x32xf32, #tpu.memory_space<vmem>>, vector<8x32xf32>
    %c0_1 = arith.constant 0 : index
    %c0_2 = arith.constant 0 : index
    %1 = vector.load %arg2[%c0_1, %c0_2] : memref<32x64xf32, #tpu.memory_space<vmem>>, vector<32x64xf32>
    %cst = arith.constant dense<0.000000e+00> : vector<8x64xf32>
    %2 = tpu.matmul %0, %1, %cst {dimension_numbers = #tpu.dot_dimension_numbers<[1], [0], [0], [1], [0, 0, 1, 1], [], []>} : vector<8x32xf32>, vector<32x64xf32>, vector<8x64xf32> -> vector<8x64xf32>
    %c0_3 = arith.constant 0 : index
    %c0_4 = arith.constant 0 : index
    %3 = vector.load %arg3[%c0_3, %c0_4] : memref<1x64xf32, #tpu.memory_space<vmem>>, vector<1x64xf32>
    %4 = vector.broadcast %3 : vector<1x64xf32> to vector<8x64xf32>
    %5 = arith.addf %2, %4 : vector<8x64xf32>
    %cst_5 = arith.constant 0.000000e+00 : f32
    %6 = vector.broadcast %cst_5 : f32 to vector<8x64xf32>
    %7 = arith.maximumf %5, %6 : vector<8x64xf32>
    %c0_6 = arith.constant 0 : index
    %c0_7 = arith.constant 0 : index
    %8 = vector.load %arg4[%c0_6, %c0_7] : memref<64x16xf32, #tpu.memory_space<vmem>>, vector<64x16xf32>
    %cst_8 = arith.constant dense<0.000000e+00> : vector<8x16xf32>
    %9 = tpu.matmul %7, %8, %cst_8 {dimension_numbers = #tpu.dot_dimension_numbers<[1], [0], [0], [1], [0, 0, 1, 1], [], []>} : vector<8x64xf32>, vector<64x16xf32>, vector<8x16xf32> -> vector<8x16xf32>
    %c0_9 = arith.constant 0 : index
    %c0_10 = arith.constant 0 : index
    %10 = vector.load %arg5[%c0_9, %c0_10] : memref<1x16xf32, #tpu.memory_space<vmem>>, vector<1x16xf32>
    %11 = vector.broadcast %10 : vector<1x16xf32> to vector<8x16xf32>
    %12 = arith.addf %9, %11 : vector<8x16xf32>
    %c0_11 = arith.constant 0 : index
    %c0_12 = arith.constant 0 : index
    %13 = vector.load %arg6[%c0_11, %c0_12] : memref<8x16xf32, #tpu.memory_space<vmem>>, vector<8x16xf32>
    tpu.vector_store %arg6[%c0_11, %c0_12], %12 {strides = array<i32>} : memref<8x16xf32, #tpu.memory_space<vmem>>, vector<8x16xf32>,
    return
  }
  func.func @transform_0(%arg0: i32) -> (i32, i32) {
    %c0_i32 = arith.constant 0 : i32
    %c0_i32_0 = arith.constant 0 : i32
    return %arg0, %c0_i32 : i32, i32
  }
  func.func @transform_1(%arg0: i32) -> (i32, i32) {
    %c0_i32 = arith.constant 0 : i32
    %c0_i32_0 = arith.constant 0 : i32
    %c0_i32_1 = arith.constant 0 : i32
    return %c0_i32, %c0_i32_0 : i32, i32
  }
  func.func @transform_2(%arg0: i32) -> (i32, i32) {
    %c0_i32 = arith.constant 0 : i32
    %c0_i32_0 = arith.constant 0 : i32
    %c0_i32_1 = arith.constant 0 : i32
    return %c0_i32, %c0_i32_0 : i32, i32
  }
  func.func @transform_3(%arg0: i32) -> (i32, i32) {
    %c0_i32 = arith.constant 0 : i32
    %c0_i32_0 = arith.constant 0 : i32
    %c0_i32_1 = arith.constant 0 : i32
    return %c0_i32, %c0_i32_0 : i32, i32
  }
  func.func @transform_4(%arg0: i32) -> (i32, i32) {
    %c0_i32 = arith.constant 0 : i32
    %c0_i32_0 = arith.constant 0 : i32
    %c0_i32_1 = arith.constant 0 : i32
    return %c0_i32, %c0_i32_0 : i32, i32
  }
  func.func @transform_5(%arg0: i32) -> (i32, i32) {
    %c0_i32 = arith.constant 0 : i32
    %c0_i32_0 = arith.constant 0 : i32
    return %arg0, %c0_i32 : i32, i32
  }
}

</mosaic_0001>

<llo_original>
// kernel: tpu_custom_call.1
$region0: #{tpu_custom_call.1}
  #allocation0 [shape = 'u32[]', space=smem, size = 0x4, offset = 0x4, fixed_abs, tag = 'smem constant byte address 0x4 - core index']
  #allocation1 [shape = 'u32[144,128]{1,0:T(1,128)}', space=vmem, size = 0x12000, scoped, tag = 'internal scratch']
  %s0 = inlined_call_operand.vmem [shape: f32[8,32], index: 0, kind: input, shape index: {}]
  %s1 = inlined_call_operand.vmem [shape: f32[32,64], index: 1, kind: input, shape index: {}]
  %s2 = inlined_call_operand.vmem [shape: f32[1,64], index: 2, kind: input, shape index: {}]
  %s3 = inlined_call_operand.vmem [shape: f32[64,16], index: 3, kind: input, shape index: {}]
  %s4 = inlined_call_operand.vmem [shape: f32[1,16], index: 4, kind: input, shape index: {}]
  %s5 = inlined_call_operand.hbm [shape: f32[8,16], index: 5, kind: output, shape index: {}]
  %s6 = sld [smem:[#allocation0]]
  $region30: #{tpu_custom_call.1} parent=0
    _
  %s8 = ssub.s32 1, %s6
  %s9 = scalar_select 0, %s8, %s6
  $region1: #{tpu_custom_call.1} parent=0
    #allocation2 [shape = 'u8[4096]{0}', space=vmem, size = 0x1000, scoped, tag = 'output window, operand 0, single buffered']
    #allocation3 [shape = 's32[1]{0}', space=sflag, size = 0x4, scoped, tag = 'scoped memory for tpu_custom_call.1']
    %10 = vsyncpa [#allocation3], 0
    // Predicated region
    $region2: #{tpu_custom_call.1} parent=1 // pred_check
      _
    $region3: #{tpu_custom_call.1} parent=1 // pred_check_branch
      %12 = sbr.rel (0) target = $region5
    $region4: #{tpu_custom_call.1} parent=1 // pred_region
      _
    $region5: #{tpu_custom_call.1} parent=1 // pred_fallthru
      _
    // Predicated region
    $region6: #{tpu_custom_call.1} parent=1 // pred_check
      _
    $region7: #{tpu_custom_call.1} parent=1 // pred_check_branch
      %14 = sbr.rel (0) target = $region9
    $region8: #{tpu_custom_call.1} parent=1 // pred_region
      _
    $region9: #{tpu_custom_call.1} parent=1 // pred_fallthru
      _
    // Predicated region
    $region10: #{tpu_custom_call.1} parent=1 // pred_check
      _
    $region11: #{tpu_custom_call.1} parent=1 // pred_check_branch
      %16 = sbr.rel (0) target = $region13
    $region12: #{tpu_custom_call.1} parent=1 // pred_region
      _
    $region13: #{tpu_custom_call.1} parent=1 // pred_fallthru
      _
    // Predicated region
    $region14: #{tpu_custom_call.1} parent=1 // pred_check
      _
    $region15: #{tpu_custom_call.1} parent=1 // pred_check_branch
      %18 = sbr.rel (0) target = $region17
    $region16: #{tpu_custom_call.1} parent=1 // pred_region
      _
    $region17: #{tpu_custom_call.1} parent=1 // pred_fallthru
      _
    // Predicated region
    $region18: #{tpu_custom_call.1} parent=1 // pred_check
      _
    $region19: #{tpu_custom_call.1} parent=1 // pred_check_branch
      %20 = sbr.rel (0) target = $region21
    $region20: #{tpu_custom_call.1} parent=1 // pred_region
      _
    $region21: #{tpu_custom_call.1} parent=1 // pred_fallthru
      _
    %v21 = vld [vmem:[%s0] sm:$0xff]
    %v22 = vld [vmem:[%s1] sm:$0xff]
    %v23 = vld [vmem:[%s1 + $0x8] sm:$0xff]
    %v24 = vld [vmem:[%s1 + $0x10] sm:$0xff]
    %v25 = vld [vmem:[%s1 + $0x18] sm:$0xff]
    %v26 = vld [vmem:[%s2] sm:$0x1]
    %v28 = vlaneseq
    %v29 = vshrl.u32 %v28, 7
    %v30 = vsub.s32 0, %v29
    %v31 = vrot.slane %v26, %v30
    %vm33 = vcmask 261120
    %v35 = vsel %vm33, %v21, 0
    %37 = vmatprep.subr.mxu0 0.0
    %38 = vmatpush1.msra.mxu0 %v22
    %39 = vmatprep.subr.mxu0 0.0
    %40 = vmatpush1.msra.mxu0 %v23
    %41 = vmatprep.subr.mxu0 0.0
    %42 = vmatpush1.msra.mxu0 %v24
    %43 = vmatprep.subr.mxu0 0.0
    %44 = vmatpush1.msra.mxu0 %v25
    %45 = vmatprep.subr.mxu0 0.0
    %46 = vmatpush1.msra.mxu0 0.0
    %47 = vmatprep.subr.mxu0 0.0
    %48 = vmatpush1.msra.mxu0 0.0
    %49 = vmatprep.subr.mxu0 0.0
    %50 = vmatpush1.msra.mxu0 0.0
    %51 = vmatprep.subr.mxu0 0.0
    %52 = vmatpush1.msra.mxu0 0.0
    %53 = vmatprep.subr.mxu0 0.0
    %54 = vmatpush1.msra.mxu0 0.0
    %55 = vmatprep.subr.mxu0 0.0
    %56 = vmatpush1.msra.mxu0 0.0
    %57 = vmatprep.subr.mxu0 0.0
    %58 = vmatpush1.msra.mxu0 0.0
    %59 = vmatprep.subr.mxu0 0.0
    %60 = vmatpush1.msra.mxu0 0.0
    %61 = vmatprep.subr.mxu0 0.0
    %62 = vmatpush1.msra.mxu0 0.0
    %63 = vmatprep.subr.mxu0 0.0
    %64 = vmatpush1.msra.mxu0 0.0
    %65 = vmatprep.subr.mxu0 0.0
    %66 = vmatpush1.msra.mxu0 0.0
    %67 = vmatprep.subr.mxu0 0.0
    %68 = vmatpush1.msra.mxu0 0.0
    %69 = vmatprep.subr.mxu0 0.0
    %70 = vmatpush1.msra.mxu0 0.0
    %71 = vmatprep.subr.mxu0 0.0
    %72 = vmatpush1.msra.mxu0 0.0
    %73 = vmatprep.subr.mxu0 0.0
    %74 = vmatpush1.msra.mxu0 0.0
    %75 = vmatprep.subr.mxu0 0.0
    %76 = vmatpush1.msra.mxu0 0.0
    %77 = vmatprep.subr.mxu0 0.0
    %78 = vmatpush1.msra.mxu0 0.0
    %79 = vmatprep.subr.mxu0 0.0
    %80 = vmatpush1.msra.mxu0 0.0
    %81 = vmatprep.subr.mxu0 0.0
    %82 = vmatpush1.msra.mxu0 0.0
    %83 = vmatprep.subr.mxu0 0.0
    %84 = vmatpush1.msra.mxu0 0.0
    %85 = vmatprep.subr.mxu0 0.0
    %86 = vmatpush1.msra.mxu0 0.0
    %87 = vmatprep.subr.mxu0 0.0
    %88 = vmatpush1.msra.mxu0 0.0
    %89 = vmatprep.subr.mxu0 0.0
    %90 = vmatpush1.msra.mxu0 0.0
    %91 = vmatprep.subr.mxu0 0.0
    %92 = vmatpush1.msra.mxu0 0.0
    %93 = vmatprep.subr.mxu0 0.0
    %94 = vmatpush1.msra.mxu0 0.0
    %95 = vmatprep.subr.mxu0 0.0
    %96 = vmatpush1.msra.mxu0 0.0
    %97 = vmatprep.subr.mxu0 0.0
    %98 = vmatpush1.msra.mxu0 0.0
    %99 = vmatprep.subr.mxu0 0.0
    %100 = vmatpush1.msra.mxu0 0.0
    %101 = vmatprep.mubr.f32.mxu0 0.0
    %102 = vmatmul.mubr.f32.gmra.mrb[0].mxu0 %v35
    %v103 = vpop.f32.mrb[0].mxu0
    %v104 = vadd.f32 %v31, %v103
    %v105 = vpop.f32.mrb[0].mxu0
    %106 = vdwg.mxu0
    %v107 = vmax.f32 %v104, 0.0
    %v108 = vld [vmem:[%s3] sm:$0xff]
    %v109 = vld [vmem:[%s3 + $0x8] sm:$0xff]
    %v110 = vld [vmem:[%s3 + $0x10] sm:$0xff]
    %v111 = vld [vmem:[%s3 + $0x18] sm:$0xff]
    %v112 = vld [vmem:[%s3 + $0x20] sm:$0xff]
    %v113 = vld [vmem:[%s3 + $0x28] sm:$0xff]
    %v114 = vld [vmem:[%s3 + $0x30] sm:$0xff]
    %v115 = vld [vmem:[%s3 + $0x38] sm:$0xff]
    %v116 = vld [vmem:[%s4] sm:$0x1]
    %v118 = vlaneseq
    %v119 = vshrl.u32 %v118, 7
    %v120 = vsub.s32 0, %v119
    %v121 = vrot.slane %v116, %v120
    %vm123 = vcmask 523264
    %v125 = vsel %vm123, %v107, 0
    %127 = vmatprep.subr.mxu0 0.0
    %128 = vmatpush1.msra.mxu0 %v108
    %129 = vmatprep.subr.mxu0 0.0
    %130 = vmatpush1.msra.mxu0 %v109
    %131 = vmatprep.subr.mxu0 0.0
    %132 = vmatpush1.msra.mxu0 %v110
    %133 = vmatprep.subr.mxu0 0.0
    %134 = vmatpush1.msra.mxu0 %v111
    %135 = vmatprep.subr.mxu0 0.0
    %136 = vmatpush1.msra.mxu0 %v112
    %137 = vmatprep.subr.mxu0 0.0
    %138 = vmatpush1.msra.mxu0 %v113
    %139 = vmatprep.subr.mxu0 0.0
    %140 = vmatpush1.msra.mxu0 %v114
    %141 = vmatprep.subr.mxu0 0.0
    %142 = vmatpush1.msra.mxu0 %v115
    %143 = vmatprep.subr.mxu0 0.0
    %144 = vmatpush1.msra.mxu0 0.0
    %145 = vmatprep.subr.mxu0 0.0
    %146 = vmatpush1.msra.mxu0 0.0
    %147 = vmatprep.subr.mxu0 0.0
    %148 = vmatpush1.msra.mxu0 0.0
    %149 = vmatprep.subr.mxu0 0.0
    %150 = vmatpush1.msra.mxu0 0.0
    %151 = vmatprep.subr.mxu0 0.0
    %152 = vmatpush1.msra.mxu0 0.0
    %153 = vmatprep.subr.mxu0 0.0
    %154 = vmatpush1.msra.mxu0 0.0
    %155 = vmatprep.subr.mxu0 0.0
    %156 = vmatpush1.msra.mxu0 0.0
    %157 = vmatprep.subr.mxu0 0.0
    %158 = vmatpush1.msra.mxu0 0.0
    %159 = vmatprep.subr.mxu0 0.0
    %160 = vmatpush1.msra.mxu0 0.0
    %161 = vmatprep.subr.mxu0 0.0
    %162 = vmatpush1.msra.mxu0 0.0
    %163 = vmatprep.subr.mxu0 0.0
    %164 = vmatpush1.msra.mxu0 0.0
    %165 = vmatprep.subr.mxu0 0.0
    %166 = vmatpush1.msra.mxu0 0.0
    %167 = vmatprep.subr.mxu0 0.0
    %168 = vmatpush1.msra.mxu0 0.0
    %169 = vmatprep.subr.mxu0 0.0
    %170 = vmatpush1.msra.mxu0 0.0
    %171 = vmatprep.subr.mxu0 0.0
    %172 = vmatpush1.msra.mxu0 0.0
    %173 = vmatprep.subr.mxu0 0.0
    %174 = vmatpush1.msra.mxu0 0.0
    %175 = vmatprep.subr.mxu0 0.0
    %176 = vmatpush1.msra.mxu0 0.0
    %177 = vmatprep.subr.mxu0 0.0
    %178 = vmatpush1.msra.mxu0 0.0
    %179 = vmatprep.subr.mxu0 0.0
    %180 = vmatpush1.msra.mxu0 0.0
    %181 = vmatprep.subr.mxu0 0.0
    %182 = vmatpush1.msra.mxu0 0.0
    %183 = vmatprep.subr.mxu0 0.0
    %184 = vmatpush1.msra.mxu0 0.0
    %185 = vmatprep.subr.mxu0 0.0
    %186 = vmatpush1.msra.mxu0 0.0
    %187 = vmatprep.subr.mxu0 0.0
    %188 = vmatpush1.msra.mxu0 0.0
    %189 = vmatprep.subr.mxu0 0.0
    %190 = vmatpush1.msra.mxu0 0.0
    %191 = vmatprep.mubr.f32.mxu0 0.0
    %192 = vmatmul.mubr.f32.gmra.mrb[0].mxu0 %v125
    %v193 = vpop.f32.mrb[0].mxu0
    %v194 = vadd.f32 %v121, %v193
    %v195 = vpop.f32.mrb[0].mxu0
    %196 = vdwg.mxu0
    %vm197 = vcmask 130048
    %198 = vst.msk [vmem:[#allocation2] sm:$0xff] %vm197, %v194
    // Predicated region
    $region22: #{tpu_custom_call.1} parent=1 // pred_check
      _
    $region23: #{tpu_custom_call.1} parent=1 // pred_check_branch
      %200 = sbr.rel (0) target = $region25
    $region24: #{tpu_custom_call.1} parent=1 // pred_region
      %s202 = ssub.s32 128, 128
      %203 = vsyncadd [#allocation3], %s202
      %s205 = sshll.u32 [#allocation2], 4
      %s206 = int_to_ptr.vmem [resolvable:$true] %s205
      %208 = dma.vmem_to_hbm [thread:$0]  %s206, 128, %s5, [#allocation3]
    $region25: #{tpu_custom_call.1} parent=1 // pred_fallthru
      _
    // Predicated region
    $region26: #{tpu_custom_call.1} parent=1 // pred_check
      _
    $region27: #{tpu_custom_call.1} parent=1 // pred_check_branch
      %210 = sbr.rel (0) target = $region29
    $region28: #{tpu_custom_call.1} parent=1 // pred_region
      %211 = dma.done [#allocation3], 128
    $region29: #{tpu_custom_call.1} parent=1 // pred_fallthru
      _
    %212 = vsyncpa [#allocation3], 1

// kernel: tpu_custom_call.1
$region0: #{tpu_custom_call.1}
  #allocation0 [shape = 'u32[]', space=smem, size = 0x4, offset = 0x4, fixed_abs, tag = 'smem constant byte address 0x4 - core index']
  #allocation1 [shape = 'u32[144,128]{1,0:T(1,128)}', space=vmem, size = 0x12000, scoped, tag = 'internal scratch']
  %s0 = inlined_call_operand.vmem [shape: f32[8,32], index: 0, kind: input, shape index: {}]
  %s1 = inlined_call_operand.vmem [shape: f32[32,64], index: 1, kind: input, shape index: {}]
  %s2 = inlined_call_operand.vmem [shape: f32[1,64], index: 2, kind: input, shape index: {}]
  %s3 = inlined_call_operand.vmem [shape: f32[64,16], index: 3, kind: input, shape index: {}]
  %s4 = inlined_call_operand.vmem [shape: f32[1,16], index: 4, kind: input, shape index: {}]
  %s5 = inlined_call_operand.hbm [shape: f32[8,16], index: 5, kind: output, shape index: {}]
  %s6 = sld [smem:[#allocation0]]
  $region30: #{tpu_custom_call.1} parent=0
    _
  %s8 = ssub.s32 1, %s6
  %s9 = scalar_select 0, %s8, %s6
  $region1: #{tpu_custom_call.1} parent=0
    #allocation2 [shape = 'u8[4096]{0}', space=vmem, size = 0x1000, scoped, tag = 'output window, operand 0, single buffered']
    #allocation3 [shape = 's32[1]{0}', space=sflag, size = 0x4, scoped, tag = 'scoped memory for tpu_custom_call.1']
    %10 = vsyncpa [#allocation3], 0
    // Predicated region
    $region2: #{tpu_custom_call.1} parent=1 // pred_check
      _
    $region3: #{tpu_custom_call.1} parent=1 // pred_check_branch
      %12 = sbr.rel (0) target = $region5
    $region4: #{tpu_custom_call.1} parent=1 // pred_region
      _
    $region5: #{tpu_custom_call.1} parent=1 // pred_fallthru
      _
    // Predicated region
    $region6: #{tpu_custom_call.1} parent=1 // pred_check
      _
    $region7: #{tpu_custom_call.1} parent=1 // pred_check_branch
      %14 = sbr.rel (0) target = $region9
    $region8: #{tpu_custom_call.1} parent=1 // pred_region
      _
    $region9: #{tpu_custom_call.1} parent=1 // pred_fallthru
      _
    // Predicated region
    $region10: #{tpu_custom_call.1} parent=1 // pred_check
      _
    $region11: #{tpu_custom_call.1} parent=1 // pred_check_branch
      %16 = sbr.rel (0) target = $region13
    $region12: #{tpu_custom_call.1} parent=1 // pred_region
      _
    $region13: #{tpu_custom_call.1} parent=1 // pred_fallthru
      _
    // Predicated region
    $region14: #{tpu_custom_call.1} parent=1 // pred_check
      _
    $region15: #{tpu_custom_call.1} parent=1 // pred_check_branch
      %18 = sbr.rel (0) target = $region17
    $region16: #{tpu_custom_call.1} parent=1 // pred_region
      _
    $region17: #{tpu_custom_call.1} parent=1 // pred_fallthru
      _
    // Predicated region
    $region18: #{tpu_custom_call.1} parent=1 // pred_check
      _
    $region19: #{tpu_custom_call.1} parent=1 // pred_check_branch
      %20 = sbr.rel (0) target = $region21
    $region20: #{tpu_custom_call.1} parent=1 // pred_region
      _
    $region21: #{tpu_custom_call.1} parent=1 // pred_fallthru
      _
    %v21 = vld [vmem:[%s0] sm:$0xff]
    %v22 = vld [vmem:[%s1] sm:$0xff]
    %v23 = vld [vmem:[%s1 + $0x8] sm:$0xff]
    %v24 = vld [vmem:[%s1 + $0x10] sm:$0xff]
    %v25 = vld [vmem:[%s1 + $0x18] sm:$0xff]
    %v26 = vld [vmem:[%s2] sm:$0x1]
    %v28 = vlaneseq
    %v29 = vshrl.u32 %v28, 7
    %v30 = vsub.s32 0, %v29
    %v31 = vrot.slane %v26, %v30
    %vm33 = vcmask 261120
    %v35 = vsel %vm33, %v21, 0
    %37 = vmatprep.subr.mxu0 0.0
    %38 = vmatpush1.msra.mxu0 %v22
    %39 = vmatprep.subr.mxu0 0.0
    %40 = vmatpush1.msra.mxu0 %v23
    %41 = vmatprep.subr.mxu0 0.0
    %42 = vmatpush1.msra.mxu0 %v24
    %43 = vmatprep.subr.mxu0 0.0
    %44 = vmatpush1.msra.mxu0 %v25
    %45 = vmatprep.subr.mxu0 0.0
    %46 = vmatpush1.msra.mxu0 0.0
    %47 = vmatprep.subr.mxu0 0.0
    %48 = vmatpush1.msra.mxu0 0.0
    %49 = vmatprep.subr.mxu0 0.0
    %50 = vmatpush1.msra.mxu0 0.0
    %51 = vmatprep.subr.mxu0 0.0
    %52 = vmatpush1.msra.mxu0 0.0
    %53 = vmatprep.subr.mxu0 0.0
    %54 = vmatpush1.msra.mxu0 0.0
    %55 = vmatprep.subr.mxu0 0.0
    %56 = vmatpush1.msra.mxu0 0.0
    %57 = vmatprep.subr.mxu0 0.0
    %58 = vmatpush1.msra.mxu0 0.0
    %59 = vmatprep.subr.mxu0 0.0
    %60 = vmatpush1.msra.mxu0 0.0
    %61 = vmatprep.subr.mxu0 0.0
    %62 = vmatpush1.msra.mxu0 0.0
    %63 = vmatprep.subr.mxu0 0.0
    %64 = vmatpush1.msra.mxu0 0.0
    %65 = vmatprep.subr.mxu0 0.0
    %66 = vmatpush1.msra.mxu0 0.0
    %67 = vmatprep.subr.mxu0 0.0
    %68 = vmatpush1.msra.mxu0 0.0
    %69 = vmatprep.subr.mxu0 0.0
    %70 = vmatpush1.msra.mxu0 0.0
    %71 = vmatprep.subr.mxu0 0.0
    %72 = vmatpush1.msra.mxu0 0.0
    %73 = vmatprep.subr.mxu0 0.0
    %74 = vmatpush1.msra.mxu0 0.0
    %75 = vmatprep.subr.mxu0 0.0
    %76 = vmatpush1.msra.mxu0 0.0
    %77 = vmatprep.subr.mxu0 0.0
    %78 = vmatpush1.msra.mxu0 0.0
    %79 = vmatprep.subr.mxu0 0.0
    %80 = vmatpush1.msra.mxu0 0.0
    %81 = vmatprep.subr.mxu0 0.0
    %82 = vmatpush1.msra.mxu0 0.0
    %83 = vmatprep.subr.mxu0 0.0
    %84 = vmatpush1.msra.mxu0 0.0
    %85 = vmatprep.subr.mxu0 0.0
    %86 = vmatpush1.msra.mxu0 0.0
    %87 = vmatprep.subr.mxu0 0.0
    %88 = vmatpush1.msra.mxu0 0.0
    %89 = vmatprep.subr.mxu0 0.0
    %90 = vmatpush1.msra.mxu0 0.0
    %91 = vmatprep.subr.mxu0 0.0
    %92 = vmatpush1.msra.mxu0 0.0
    %93 = vmatprep.subr.mxu0 0.0
    %94 = vmatpush1.msra.mxu0 0.0
    %95 = vmatprep.subr.mxu0 0.0
    %96 = vmatpush1.msra.mxu0 0.0
    %97 = vmatprep.subr.mxu0 0.0
    %98 = vmatpush1.msra.mxu0 0.0
    %99 = vmatprep.subr.mxu0 0.0
    %100 = vmatpush1.msra.mxu0 0.0
    %101 = vmatprep.mubr.f32.mxu0 0.0
    %102 = vmatmul.mubr.f32.gmra.mrb[0].mxu0 %v35
    %v103 = vpop.f32.mrb[0].mxu0
    %v104 = vadd.f32 %v31, %v103
    %v105 = vpop.f32.mrb[0].mxu0
    %106 = vdwg.mxu0
    %v107 = vmax.f32 %v104, 0.0
    %v108 = vld [vmem:[%s3] sm:$0xff]
    %v109 = vld [vmem:[%s3 + $0x8] sm:$0xff]
    %v110 = vld [vmem:[%s3 + $0x10] sm:$0xff]
    %v111 = vld [vmem:[%s3 + $0x18] sm:$0xff]
    %v112 = vld [vmem:[%s3 + $0x20] sm:$0xff]
    %v113 = vld [vmem:[%s3 + $0x28] sm:$0xff]
    %v114 = vld [vmem:[%s3 + $0x30] sm:$0xff]
    %v115 = vld [vmem:[%s3 + $0x38] sm:$0xff]
    %v116 = vld [vmem:[%s4] sm:$0x1]
    %v118 = vlaneseq
    %v119 = vshrl.u32 %v118, 7
    %v120 = vsub.s32 0, %v119
    %v121 = vrot.slane %v116, %v120
    %vm123 = vcmask 523264
    %v125 = vsel %vm123, %v107, 0
    %127 = vmatprep.subr.mxu0 0.0
    %128 = vmatpush1.msra.mxu0 %v108
    %129 = vmatprep.subr.mxu0 0.0
    %130 = vmatpush1.msra.mxu0 %v109
    %131 = vmatprep.subr.mxu0 0.0
    %132 = vmatpush1.msra.mxu0 %v110
    %133 = vmatprep.subr.mxu0 0.0
    %134 = vmatpush1.msra.mxu0 %v111
    %135 = vmatprep.subr.mxu0 0.0
    %136 = vmatpush1.msra.mxu0 %v112
    %137 = vmatprep.subr.mxu0 0.0
    %138 = vmatpush1.msra.mxu0 %v113
    %139 = vmatprep.subr.mxu0 0.0
    %140 = vmatpush1.msra.mxu0 %v114
    %141 = vmatprep.subr.mxu0 0.0
    %142 = vmatpush1.msra.mxu0 %v115
    %143 = vmatprep.subr.mxu0 0.0
    %144 = vmatpush1.msra.mxu0 0.0
    %145 = vmatprep.subr.mxu0 0.0
    %146 = vmatpush1.msra.mxu0 0.0
    %147 = vmatprep.subr.mxu0 0.0
    %148 = vmatpush1.msra.mxu0 0.0
    %149 = vmatprep.subr.mxu0 0.0
    %150 = vmatpush1.msra.mxu0 0.0
    %151 = vmatprep.subr.mxu0 0.0
    %152 = vmatpush1.msra.mxu0 0.0
    %153 = vmatprep.subr.mxu0 0.0
    %154 = vmatpush1.msra.mxu0 0.0
    %155 = vmatprep.subr.mxu0 0.0
    %156 = vmatpush1.msra.mxu0 0.0
    %157 = vmatprep.subr.mxu0 0.0
    %158 = vmatpush1.msra.mxu0 0.0
    %159 = vmatprep.subr.mxu0 0.0
    %160 = vmatpush1.msra.mxu0 0.0
    %161 = vmatprep.subr.mxu0 0.0
    %162 = vmatpush1.msra.mxu0 0.0
    %163 = vmatprep.subr.mxu0 0.0
    %164 = vmatpush1.msra.mxu0 0.0
    %165 = vmatprep.subr.mxu0 0.0
    %166 = vmatpush1.msra.mxu0 0.0
    %167 = vmatprep.subr.mxu0 0.0
    %168 = vmatpush1.msra.mxu0 0.0
    %169 = vmatprep.subr.mxu0 0.0
    %170 = vmatpush1.msra.mxu0 0.0
    %171 = vmatprep.subr.mxu0 0.0
    %172 = vmatpush1.msra.mxu0 0.0
    %173 = vmatprep.subr.mxu0 0.0
    %174 = vmatpush1.msra.mxu0 0.0
    %175 = vmatprep.subr.mxu0 0.0
    %176 = vmatpush1.msra.mxu0 0.0
    %177 = vmatprep.subr.mxu0 0.0
    %178 = vmatpush1.msra.mxu0 0.0
    %179 = vmatprep.subr.mxu0 0.0
    %180 = vmatpush1.msra.mxu0 0.0
    %181 = vmatprep.subr.mxu0 0.0
    %182 = vmatpush1.msra.mxu0 0.0
    %183 = vmatprep.subr.mxu0 0.0
    %184 = vmatpush1.msra.mxu0 0.0
    %185 = vmatprep.subr.mxu0 0.0
    %186 = vmatpush1.msra.mxu0 0.0
    %187 = vmatprep.subr.mxu0 0.0
    %188 = vmatpush1.msra.mxu0 0.0
    %189 = vmatprep.subr.mxu0 0.0
    %190 = vmatpush1.msra.mxu0 0.0
    %191 = vmatprep.mubr.f32.mxu0 0.0
    %192 = vmatmul.mubr.f32.gmra.mrb[0].mxu0 %v125
    %v193 = vpop.f32.mrb[0].mxu0
    %v194 = vadd.f32 %v121, %v193
    %v195 = vpop.f32.mrb[0].mxu0
    %196 = vdwg.mxu0
    %vm197 = vcmask 130048
    %198 = vst.msk [vmem:[#allocation2] sm:$0xff] %vm197, %v194
    // Predicated region
    $region22: #{tpu_custom_call.1} parent=1 // pred_check
      _
    $region23: #{tpu_custom_call.1} parent=1 // pred_check_branch
      %200 = sbr.rel (0) target = $region25
    $region24: #{tpu_custom_call.1} parent=1 // pred_region
      %s202 = ssub.s32 128, 128
      %203 = vsyncadd [#allocation3], %s202
      %s205 = sshll.u32 [#allocation2], 4
      %s206 = int_to_ptr.vmem [resolvable:$true] %s205
      %208 = dma.vmem_to_hbm [thread:$0]  %s206, 128, %s5, [#allocation3]
    $region25: #{tpu_custom_call.1} parent=1 // pred_fallthru
      _
    // Predicated region
    $region26: #{tpu_custom_call.1} parent=1 // pred_check
      _
    $region27: #{tpu_custom_call.1} parent=1 // pred_check_branch
      %210 = sbr.rel (0) target = $region29
    $region28: #{tpu_custom_call.1} parent=1 // pred_region
      %211 = dma.done [#allocation3], 128
    $region29: #{tpu_custom_call.1} parent=1 // pred_fallthru
      _
    %212 = vsyncpa [#allocation3], 1

</llo_original>
